<compile_context>
chip_gen: v6e
topology: v6e:2x2x1
jax: 0.10.0
libtpu: 0.0.40
codegen_flags: <defaults>
</compile_context>

<pallas_src>
import functools
import math
import numpy as np

import jax
import jax.numpy as jnp
from jax import lax
from jax.experimental import pallas as pl
from jax.experimental.pallas import tpu as pltpu

EPS = 1e-5  # PyTorch LayerNorm default


def _layernorm(x, gamma, beta):
    # x: (N, D) f32; gamma/beta: (1, D) f32; biased variance, eps=1e-5 (PyTorch).
    mean = jnp.mean(x, axis=-1, keepdims=True)
    var = jnp.mean((x - mean) ** 2, axis=-1, keepdims=True)
    return (x - mean) * lax.rsqrt(var + EPS) * gamma + beta


def _gelu_exact(x):
    # PyTorch nn.GELU() default: exact erf-based GELU.
    return 0.5 * x * (1.0 + lax.erf(x * (1.0 / math.sqrt(2.0))))


def _gelu_tanh(x):
    # tanh-approximate GELU: transcendental goes to the EUP slot (free vs. VALU).
    c = math.sqrt(2.0 / math.pi)
    return 0.5 * x * (1.0 + jnp.tanh(c * (x + 0.044715 * (x * x * x))))


def self_fourier_kernel(
    x_ref,            # (bB, S, D) f32
    cd_ref, sd_ref,   # (D, D) mm-dtype: cos / sin feature-DFT matrices
    cs_ref, nss_ref,  # (S, S) mm-dtype: cos / -sin sequence-DFT matrices
    g1_ref, b1_ref,   # (1, D) f32  LayerNorm 1 (pre-FNet)
    g2_ref, b2_ref,   # (1, D) f32  LayerNorm 2 (pre-FF)
    w1_ref, bb1_ref,  # (D, tH) mm-dtype, (1, tH) f32   FF linear 1 (H-tile)
    w2_ref, bb2_ref,  # (tH, D) mm-dtype, (1, D) f32    FF linear 2 (H-tile)
    out_ref,          # (bB, S, D) f32
    xn2_ref,          # (bB*S, D) mm-dtype scratch: LayerNorm2(x1), matmul-ready
    acc_ref,          # (bB*S, D) f32 scratch: output accumulator
    *, gelu_approx,
):
    j = pl.program_id(1)          # H-tile index (reduction / "arbitrary" axis)
    bB, S, D = x_ref.shape
    mm = cd_ref.dtype

    # ---- attn branch: once per batch block (first H-tile) --------------------
    @pl.when(j == 0)
    def _attn_branch():
        x = x_ref[...].reshape(bB * S, D)                        # f32
        xn = _layernorm(x, g1_ref[...], b1_ref[...]).astype(mm)
        # Feature-dim DFT (real / imag), batched over bB*S rows (two MXU launches).
        a_re = jnp.dot(xn, cd_ref[...], preferred_element_type=jnp.float32)
        a_im = jnp.dot(xn, sd_ref[...], preferred_element_type=jnp.float32)
        # Sequence-dim DFT per batch row; results feed the residual / LN2 /
        # accumulator directly -- no [A;B] VMEM scratch round-trip.
        for b in range(bB):
            rows = pl.ds(b * S, S)
            f_b = (
                jnp.dot(cs_ref[...], a_re[b * S:(b + 1) * S].astype(mm),
                        preferred_element_type=jnp.float32)
                + jnp.dot(nss_ref[...], a_im[b * S:(b + 1) * S].astype(mm),
                          preferred_element_type=jnp.float32)
            )
            x1_b = f_b + x[b * S:(b + 1) * S]                    # residual (f32)
            xn2_ref[rows, :] = _layernorm(x1_b, g2_ref[...],
                                          b2_ref[...]).astype(mm)
            acc_ref[rows, :] = x1_b + bb2_ref[...]               # residual + final bias

    # ---- ff branch: one H-tile per grid step, accumulate into acc ------------
    h = jnp.dot(xn2_ref[...], w1_ref[...],
                preferred_element_type=jnp.float32) + bb1_ref[...]   # (bB*S, tH) f32
    h = _gelu_tanh(h) if gelu_approx else _gelu_exact(h)
    acc_ref[...] += jnp.dot(h.astype(mm), w2_ref[...],
                            preferred_element_type=jnp.float32)      # (bB*S, D) f32

    @pl.when(j == pl.num_programs(1) - 1)
    def _finalize():
        out_ref[...] = acc_ref[...].reshape(bB, S, D).astype(out_ref.dtype)


def _vmem_capacity():
    try:
        return int(pltpu.get_tpu_info().vmem_capacity_bytes)
    except Exception:
        return 128 * 2**20  # v5e/v6e default


def _pick_tile_h(H, small_vmem):
    # MXU-friendly H-tiles; prefer 256 on 64 MiB-VMEM parts (v7x), 512 otherwise.
    cands = (256, 128, 512, 64) if small_vmem else (512, 256, 128, 64)
    for t in cands:
        if H % t == 0:
            return t
    return H


def _pick_batch_block(B, small_vmem):
    # Fold a few batch rows into one block so FF weights are reused across them.
    cap = 2 if small_vmem else 4
    for d in range(min(B, cap), 0, -1):
        if B % d == 0:
            return d
    return 1


def _dft_cos_sin(n):
    # Angles with the index product reduced mod n (int64) for accuracy at large n.
    idx = np.arange(n, dtype=np.int64)
    ang = 2.0 * np.pi * ((idx[:, None] * idx[None, :]) % n).astype(np.float64) / n
    return np.cos(ang), np.sin(ang)


def _build_call(B, S, D, H, tH, bB, out_dtype, mm_dtype, use_buffered, gelu_approx):
    nB, nH = B // bB, H // tH
    mm_b = jnp.dtype(mm_dtype).itemsize
    f32b = 4

    def const_spec(shape):
        idx = lambda b, j: (0,) * len(shape)
        if use_buffered:
            # Grid-invariant input: a single VMEM buffer is enough (DMA'd once).
            return pl.BlockSpec(shape, idx, pipeline_mode=pl.Buffered(1))
        return pl.BlockSpec(shape, idx)

    def weight_spec(shape, idx):
        if use_buffered:
            # Deeper buffering: prefetch j=1,2 tiles under the long j==0 step.
            return pl.BlockSpec(shape, idx, pipeline_mode=pl.Buffered(3))
        return pl.BlockSpec(shape, idx)

    in_specs = [
        pl.BlockSpec((bB, S, D), lambda b, j: (b, 0, 0)),   # x
        const_spec((D, D)), const_spec((D, D)),             # Cd, Sd
        const_spec((S, S)), const_spec((S, S)),             # Cs, -Ss
        const_spec((1, D)), const_spec((1, D)),             # LN1 gamma / beta
        const_spec((1, D)), const_spec((1, D)),             # LN2 gamma / beta
        weight_spec((D, tH), lambda b, j: (0, j)),          # w1 H-tile
        weight_spec((1, tH), lambda b, j: (0, j)),          # b1 H-tile
        weight_spec((tH, D), lambda b, j: (j, 0)),          # w2 H-tile
        const_spec((1, D)),                                 # b2 (final bias)
    ]
    out_specs = pl.BlockSpec((bB, S, D), lambda b, j: (b, 0, 0))

    scratch_shapes = [
        pltpu.VMEM((bB * S, D), mm_dtype),   # LayerNorm2(x1), matmul-ready
        pltpu.VMEM((bB * S, D), jnp.float32),  # output accumulator
    ]

    # --- VMEM budget (actual per-step footprint, with headroom) ---------------
    nb_const = 1 if use_buffered else 2
    nb_w = 3 if use_buffered else 2
    vmem_est = (
        4 * bB * S * D * f32b                              # x + out blocks (double-buffered)
        + nb_const * (2 * D * D + 2 * S * S) * mm_b        # DFT matrices
        + nb_const * 5 * D * f32b                          # LN params + final bias
        + nb_w * (2 * D * tH * mm_b + tH * f32b)           # w1/b1/w2 tiles
        + bB * S * D * (mm_b + f32b)                       # VMEM scratches
        + bB * S * (4 * D + tH) * f32b                     # live f32 intermediates
    )
    cap = _vmem_capacity()
    vmem_limit = int(min(int(0.85 * cap), max(32 * 2**20, 2 * vmem_est)))

    # --- advisory cost estimate (weights are re-read once per batch block) ----
    flops = 4 * B * S * D * (D + S + H)
    bytes_accessed = (
        2 * B * S * D * f32b
        + (2 * D * D + 2 * S * S) * mm_b + 5 * D * f32b
        + nB * (2 * D * H * mm_b + H * f32b)
    )
    cost = pl.CostEstimate(flops=int(flops),
                           transcendentals=int(B * S * H),
                           bytes_accessed=int(bytes_accessed))

    kernel = functools.partial(self_fourier_kernel, gelu_approx=gelu_approx)

    return pl.pallas_call(
        kernel,
        out_shape=jax.ShapeDtypeStruct((B, S, D), out_dtype),
        grid_spec=pltpu.PrefetchScalarGridSpec(
            num_scalar_prefetch=0,
            grid=(nB, nH),
            in_specs=in_specs,
            out_specs=out_specs,
            scratch_shapes=scratch_shapes,
        ),
        compiler_params=pltpu.CompilerParams(
            dimension_semantics=("parallel", "arbitrary"),
            vmem_limit_bytes=vmem_limit,
        ),
        cost_estimate=cost,
    )


def self_fourier(x, params, *, matmul_dtype=jnp.bfloat16, tile_h=None,
                 batch_block=None, gelu_approx=True):
    """x: (B, S, D) float32.  params: dict from init_params()."""
    B, S, D = x.shape
    H = params["w1"].shape[1]
    small_vmem = _vmem_capacity() <= 80 * 2**20   # v7x-class parts (64 MiB / TC)

    tH = tile_h if tile_h is not None else _pick_tile_h(H, small_vmem)
    assert H % tH == 0, (H, tH)
    bB = batch_block if batch_block is not None else _pick_batch_block(B, small_vmem)
    assert B % bB == 0, (B, bB)

    # DFT matrices (host-side glue, cast to the matmul dtype).
    cd, sd = _dft_cos_sin(D)
    cs, ss = _dft_cos_sin(S)
    cd = jnp.asarray(cd, matmul_dtype)
    sd = jnp.asarray(sd, matmul_dtype)
    cs = jnp.asarray(cs, matmul_dtype)
    nss = jnp.asarray(-ss, matmul_dtype)

    args = (
        x, cd, sd, cs, nss,
        params["g1"], params["be1"], params["g2"], params["be2"],
        params["w1"].astype(matmul_dtype), params["b1"],
        params["w2"].astype(matmul_dtype), params["b2"],
    )

    try:
        return _build_call(B, S, D, H, tH, bB, x.dtype, matmul_dtype,
                           True, gelu_approx)(*args)
    except Exception:
        # Fallback: default (double-buffered) pipelining for every operand.  The
        # fallback is strictly more standard than the Buffered(1)/Buffered(3)
        # build, so any genuine failure (e.g. VMEM OOM at large shapes) also
        # fails here and surfaces rather than being masked.
        return _build_call(B, S, D, H, tH, bB, x.dtype, matmul_dtype,
                           False, gelu_approx)(*args)


def init_params(key, d_model, mlp_dim):
    # Deterministic synthetic init (shapes match the nn.Module's __init__).
    k1, k2, k3, k4 = jax.random.split(key, 4)
    lim1 = 1.0 / math.sqrt(d_model)
    lim2 = 1.0 / math.sqrt(mlp_dim)
    return {
        "g1": jnp.ones((1, d_model), jnp.float32),
        "be1": jnp.zeros((1, d_model), jnp.float32),
        "g2": jnp.ones((1, d_model), jnp.float32),
        "be2": jnp.zeros((1, d_model), jnp.float32),
        "w1": jax.random.uniform(k1, (d_model, mlp_dim), jnp.float32, -lim1, lim1),
        "b1": jax.random.uniform(k2, (1, mlp_dim), jnp.float32, -lim1, lim1),
        "w2": jax.random.uniform(k3, (mlp_dim, d_model), jnp.float32, -lim2, lim2),
        "b2": jax.random.uniform(k4, (1, d_model), jnp.float32, -lim2, lim2),
    }


def self_fourier_ref(x, params):
    # Pure-JAX reference for validation (true FFT, exact erf GELU, all f32).
    def ln(v, g, b):
        m = jnp.mean(v, -1, keepdims=True)
        var = jnp.mean((v - m) ** 2, -1, keepdims=True)
        return (v - m) / jnp.sqrt(var + EPS) * g + b

    xn = ln(x, params["g1"], params["be1"])
    f = jnp.real(jnp.fft.fft(jnp.fft.fft(xn, axis=-1), axis=-2))
    x1 = f + x
    xn2 = ln(x1, params["g2"], params["be2"])
    h = xn2 @ params["w1"] + params["b1"]
    h = 0.5 * h * (1.0 + lax.erf(h / math.sqrt(2.0)))
    y = h @ params["w2"] + params["b2"]
    return x1 + y


if __name__ == "__main__":
    B, S, D, H = 2, 8, 32, 64
    key = jax.random.PRNGKey(0)
    kx, kp = jax.random.split(key)
    x = jax.random.normal(kx, (B, S, D), dtype=jnp.float32)
    params = init_params(kp, D, H)

    ref = self_fourier_ref(x, params)

    # f32-matmul + exact-GELU path: tight check against the true-FFT reference.
    out_f32 = jax.block_until_ready(
        self_fourier(x, params, matmul_dtype=jnp.float32, gelu_approx=False))
    assert out_f32.shape == (B, S, D)
    assert jnp.allclose(out_f32, ref, atol=1e-3, rtol=1e-3), float(
        jnp.max(jnp.abs(out_f32 - ref)))

    # Default path (bf16 matmuls, tanh GELU): bf16-appropriate tolerance.
    out = jax.block_until_ready(self_fourier(x, params))
    assert out.shape == (B, S, D)
    err = float(jnp.max(jnp.abs(out - ref)))
    scale = float(jnp.max(jnp.abs(ref)))
    assert err <= 2e-2 * scale + 2e-2, (err, scale)

    print("KERNEL_OK")
</pallas_src>

<mosaic_0001>
module attributes {stable_mosaic.version = 11 : i64} {
  func.func @self_fourier_kernel(%arg0: i32, %arg1: i32, %arg2: memref<2x8x32xf32, #tpu.memory_space<vmem>>, %arg3: memref<32x32xf32, #tpu.memory_space<vmem>>, %arg4: memref<32x32xf32, #tpu.memory_space<vmem>>, %arg5: memref<8x8xf32, #tpu.memory_space<vmem>>, %arg6: memref<8x8xf32, #tpu.memory_space<vmem>>, %arg7: memref<1x32xf32, #tpu.memory_space<vmem>>, %arg8: memref<1x32xf32, #tpu.memory_space<vmem>>, %arg9: memref<1x32xf32, #tpu.memory_space<vmem>>, %arg10: memref<1x32xf32, #tpu.memory_space<vmem>>, %arg11: memref<32x64xf32, #tpu.memory_space<vmem>>, %arg12: memref<1x64xf32, #tpu.memory_space<vmem>>, %arg13: memref<64x32xf32, #tpu.memory_space<vmem>>, %arg14: memref<1x32xf32, #tpu.memory_space<vmem>>, %arg15: memref<2x8x32xf32, #tpu.memory_space<vmem>>, %arg16: memref<16x32xf32, #tpu.memory_space<vmem>>, %arg17: memref<16x32xf32, #tpu.memory_space<vmem>>) attributes {dimension_semantics = [#tpu.dimension_semantics<parallel>, #tpu.dimension_semantics<arbitrary>], iteration_bounds = array<i64: 1, 1>, scalar_prefetch = 0 : i64, scratch_operands = 2 : i64, tpu.core_type = #tpu.core_type<tc>, window_params = [{transform_indices = @transform_0, window_bounds = array<i64: 2, 8, 32>}, {pipeline_mode = #tpu.pipeline_mode<synchronous>, transform_indices = @transform_1, window_bounds = array<i64: 32, 32>}, {pipeline_mode = #tpu.pipeline_mode<synchronous>, transform_indices = @transform_2, window_bounds = array<i64: 32, 32>}, {pipeline_mode = #tpu.pipeline_mode<synchronous>, transform_indices = @transform_3, window_bounds = array<i64: 8, 8>}, {pipeline_mode = #tpu.pipeline_mode<synchronous>, transform_indices = @transform_4, window_bounds = array<i64: 8, 8>}, {pipeline_mode = #tpu.pipeline_mode<synchronous>, transform_indices = @transform_5, window_bounds = array<i64: 1, 32>}, {pipeline_mode = #tpu.pipeline_mode<synchronous>, transform_indices = @transform_6, window_bounds = array<i64: 1, 32>}, {pipeline_mode = #tpu.pipeline_mode<synchronous>, transform_indices = @transform_7, window_bounds = array<i64: 1, 32>}, {pipeline_mode = #tpu.pipeline_mode<synchronous>, transform_indices = @transform_8, window_bounds = array<i64: 1, 32>}, {transform_indices = @transform_9, window_bounds = array<i64: 32, 64>}, {transform_indices = @transform_10, window_bounds = array<i64: 1, 64>}, {transform_indices = @transform_11, window_bounds = array<i64: 64, 32>}, {pipeline_mode = #tpu.pipeline_mode<synchronous>, transform_indices = @transform_12, window_bounds = array<i64: 1, 32>}, {transform_indices = @transform_13, window_bounds = array<i64: 2, 8, 32>}]} {
    %c0_i32 = arith.constant 0 : i32
    %0 = arith.cmpi eq, %arg1, %c0_i32 : i32
    %1 = arith.extui %0 : i1 to i32
    %c0_i32_0 = arith.constant 0 : i32
    %2 = arith.cmpi ne, %1, %c0_i32_0 : i32
    scf.if %2 {
      %c0_18 = arith.constant 0 : index
      %c0_19 = arith.constant 0 : index
      %c0_20 = arith.constant 0 : index
      %25 = vector.load %arg2[%c0_18, %c0_19, %c0_20] : memref<2x8x32xf32, #tpu.memory_space<vmem>>, vector<2x8x32xf32>
      %26 = vector.shape_cast %25 : vector<2x8x32xf32> to vector<16x32xf32>
      %c0_21 = arith.constant 0 : index
      %c0_22 = arith.constant 0 : index
      %27 = vector.load %arg7[%c0_21, %c0_22] : memref<1x32xf32, #tpu.memory_space<vmem>>, vector<1x32xf32>
      %c0_23 = arith.constant 0 : index
      %c0_24 = arith.constant 0 : index
      %28 = vector.load %arg8[%c0_23, %c0_24] : memref<1x32xf32, #tpu.memory_space<vmem>>, vector<1x32xf32>
      %cst_25 = arith.constant dense<0.000000e+00> : vector<16xf32>
      %29 = vector.multi_reduction <add>, %26, %cst_25 [1] : vector<16x32xf32> to vector<16xf32>
      %30 = vector.shape_cast %29 : vector<16xf32> to vector<16x1xf32>
      %cst_26 = arith.constant 3.200000e+01 : f32
      %31 = vector.broadcast %cst_26 : f32 to vector<16x1xf32>
      %32 = arith.divf %30, %31 : vector<16x1xf32>
      %33 = vector.broadcast %32 : vector<16x1xf32> to vector<16x32xf32>
      %34 = arith.subf %26, %33 : vector<16x32xf32>
      %35 = arith.mulf %34, %34 : vector<16x32xf32>
      %cst_27 = arith.constant dense<0.000000e+00> : vector<16xf32>
      %36 = vector.multi_reduction <add>, %35, %cst_27 [1] : vector<16x32xf32> to vector<16xf32>
      %37 = vector.shape_cast %36 : vector<16xf32> to vector<16x1xf32>
      %cst_28 = arith.constant 3.200000e+01 : f32
      %38 = vector.broadcast %cst_28 : f32 to vector<16x1xf32>
      %39 = arith.divf %37, %38 : vector<16x1xf32>
      %40 = vector.broadcast %32 : vector<16x1xf32> to vector<16x32xf32>
      %41 = arith.subf %26, %40 : vector<16x32xf32>
      %cst_29 = arith.constant 9.99999974E-6 : f32
      %42 = vector.broadcast %cst_29 : f32 to vector<16x1xf32>
      %43 = arith.addf %39, %42 : vector<16x1xf32>
      %44 = math.rsqrt %43 : vector<16x1xf32>
      %45 = vector.broadcast %44 : vector<16x1xf32> to vector<16x32xf32>
      %46 = arith.mulf %41, %45 : vector<16x32xf32>
      %47 = vector.broadcast %27 : vector<1x32xf32> to vector<16x32xf32>
      %48 = arith.mulf %46, %47 : vector<16x32xf32>
      %49 = vector.broadcast %28 : vector<1x32xf32> to vector<16x32xf32>
      %50 = arith.addf %48, %49 : vector<16x32xf32>
      %c0_30 = arith.constant 0 : index
      %c0_31 = arith.constant 0 : index
      %51 = vector.load %arg3[%c0_30, %c0_31] : memref<32x32xf32, #tpu.memory_space<vmem>>, vector<32x32xf32>
      %cst_32 = arith.constant dense<0.000000e+00> : vector<16x32xf32>
      %52 = tpu.matmul %50, %51, %cst_32 {dimension_numbers = #tpu.dot_dimension_numbers<[1], [0], [0], [1], [0, 0, 1, 1], [], []>} : vector<16x32xf32>, vector<32x32xf32>, vector<16x32xf32> -> vector<16x32xf32>
      %c0_33 = arith.constant 0 : index
      %c0_34 = arith.constant 0 : index
      %53 = vector.load %arg4[%c0_33, %c0_34] : memref<32x32xf32, #tpu.memory_space<vmem>>, vector<32x32xf32>
      %cst_35 = arith.constant dense<0.000000e+00> : vector<16x32xf32>
      %54 = tpu.matmul %50, %53, %cst_35 {dimension_numbers = #tpu.dot_dimension_numbers<[1], [0], [0], [1], [0, 0, 1, 1], [], []>} : vector<16x32xf32>, vector<32x32xf32>, vector<16x32xf32> -> vector<16x32xf32>
      %c0_36 = arith.constant 0 : index
      %c0_37 = arith.constant 0 : index
      %55 = vector.load %arg5[%c0_36, %c0_37] : memref<8x8xf32, #tpu.memory_space<vmem>>, vector<8x8xf32>
      %56 = vector.extract_strided_slice %52 {offsets = [0, 0], sizes = [8, 32], strides = [1, 1]} : vector<16x32xf32> to vector<8x32xf32>
      %cst_38 = arith.constant dense<0.000000e+00> : vector<8x32xf32>
      %57 = tpu.matmul %55, %56, %cst_38 {dimension_numbers = #tpu.dot_dimension_numbers<[1], [0], [0], [1], [0, 0, 1, 1], [], []>} : vector<8x8xf32>, vector<8x32xf32>, vector<8x32xf32> -> vector<8x32xf32>
      %c0_39 = arith.constant 0 : index
      %c0_40 = arith.constant 0 : index
      %58 = vector.load %arg6[%c0_39, %c0_40] : memref<8x8xf32, #tpu.memory_space<vmem>>, vector<8x8xf32>
      %59 = vector.extract_strided_slice %54 {offsets = [0, 0], sizes = [8, 32], strides = [1, 1]} : vector<16x32xf32> to vector<8x32xf32>
      %cst_41 = arith.constant dense<0.000000e+00> : vector<8x32xf32>
      %60 = tpu.matmul %58, %59, %cst_41 {dimension_numbers = #tpu.dot_dimension_numbers<[1], [0], [0], [1], [0, 0, 1, 1], [], []>} : vector<8x8xf32>, vector<8x32xf32>, vector<8x32xf32> -> vector<8x32xf32>
      %61 = arith.addf %57, %60 : vector<8x32xf32>
      %62 = vector.extract_strided_slice %26 {offsets = [0, 0], sizes = [8, 32], strides = [1, 1]} : vector<16x32xf32> to vector<8x32xf32>
      %63 = arith.addf %61, %62 : vector<8x32xf32>
      %c0_42 = arith.constant 0 : index
      %c0_43 = arith.constant 0 : index
      %64 = vector.load %arg9[%c0_42, %c0_43] : memref<1x32xf32, #tpu.memory_space<vmem>>, vector<1x32xf32>
      %c0_44 = arith.constant 0 : index
      %c0_45 = arith.constant 0 : index
      %65 = vector.load %arg10[%c0_44, %c0_45] : memref<1x32xf32, #tpu.memory_space<vmem>>, vector<1x32xf32>
      %cst_46 = arith.constant dense<0.000000e+00> : vector<8xf32>
      %66 = vector.multi_reduction <add>, %63, %cst_46 [1] : vector<8x32xf32> to vector<8xf32>
      %67 = vector.shape_cast %66 : vector<8xf32> to vector<8x1xf32>
      %cst_47 = arith.constant 3.200000e+01 : f32
      %68 = vector.broadcast %cst_47 : f32 to vector<8x1xf32>
      %69 = arith.divf %67, %68 : vector<8x1xf32>
      %70 = vector.broadcast %69 : vector<8x1xf32> to vector<8x32xf32>
      %71 = arith.subf %63, %70 : vector<8x32xf32>
      %72 = arith.mulf %71, %71 : vector<8x32xf32>
      %cst_48 = arith.constant dense<0.000000e+00> : vector<8xf32>
      %73 = vector.multi_reduction <add>, %72, %cst_48 [1] : vector<8x32xf32> to vector<8xf32>
      %74 = vector.shape_cast %73 : vector<8xf32> to vector<8x1xf32>
      %cst_49 = arith.constant 3.200000e+01 : f32
      %75 = vector.broadcast %cst_49 : f32 to vector<8x1xf32>
      %76 = arith.divf %74, %75 : vector<8x1xf32>
      %77 = vector.broadcast %69 : vector<8x1xf32> to vector<8x32xf32>
      %78 = arith.subf %63, %77 : vector<8x32xf32>
      %cst_50 = arith.constant 9.99999974E-6 : f32
      %79 = vector.broadcast %cst_50 : f32 to vector<8x1xf32>
      %80 = arith.addf %76, %79 : vector<8x1xf32>
      %81 = math.rsqrt %80 : vector<8x1xf32>
      %82 = vector.broadcast %81 : vector<8x1xf32> to vector<8x32xf32>
      %83 = arith.mulf %78, %82 : vector<8x32xf32>
      %84 = vector.broadcast %64 : vector<1x32xf32> to vector<8x32xf32>
      %85 = arith.mulf %83, %84 : vector<8x32xf32>
      %86 = vector.broadcast %65 : vector<1x32xf32> to vector<8x32xf32>
      %87 = arith.addf %85, %86 : vector<8x32xf32>
      %c0_51 = arith.constant 0 : index
      %c0_52 = arith.constant 0 : index
      %88 = vector.load %arg16[%c0_51, %c0_52] : memref<16x32xf32, #tpu.memory_space<vmem>>, vector<8x32xf32>
      tpu.vector_store %arg16[%c0_51, %c0_52], %87 {strides = array<i32>} : memref<16x32xf32, #tpu.memory_space<vmem>>, vector<8x32xf32>,
      %c0_53 = arith.constant 0 : index
      %c0_54 = arith.constant 0 : index
      %89 = vector.load %arg14[%c0_53, %c0_54] : memref<1x32xf32, #tpu.memory_space<vmem>>, vector<1x32xf32>
      %90 = vector.broadcast %89 : vector<1x32xf32> to vector<8x32xf32>
      %91 = arith.addf %63, %90 : vector<8x32xf32>
      %c0_55 = arith.constant 0 : index
      %c0_56 = arith.constant 0 : index
      %92 = vector.load %arg17[%c0_55, %c0_56] : memref<16x32xf32, #tpu.memory_space<vmem>>, vector<8x32xf32>
      tpu.vector_store %arg17[%c0_55, %c0_56], %91 {strides = array<i32>} : memref<16x32xf32, #tpu.memory_space<vmem>>, vector<8x32xf32>,
      %c0_57 = arith.constant 0 : index
      %c0_58 = arith.constant 0 : index
      %93 = vector.load %arg5[%c0_57, %c0_58] : memref<8x8xf32, #tpu.memory_space<vmem>>, vector<8x8xf32>
      %94 = vector.extract_strided_slice %52 {offsets = [8, 0], sizes = [8, 32], strides = [1, 1]} : vector<16x32xf32> to vector<8x32xf32>
      %cst_59 = arith.constant dense<0.000000e+00> : vector<8x32xf32>
      %95 = tpu.matmul %93, %94, %cst_59 {dimension_numbers = #tpu.dot_dimension_numbers<[1], [0], [0], [1], [0, 0, 1, 1], [], []>} : vector<8x8xf32>, vector<8x32xf32>, vector<8x32xf32> -> vector<8x32xf32>
      %c0_60 = arith.constant 0 : index
      %c0_61 = arith.constant 0 : index
      %96 = vector.load %arg6[%c0_60, %c0_61] : memref<8x8xf32, #tpu.memory_space<vmem>>, vector<8x8xf32>
      %97 = vector.extract_strided_slice %54 {offsets = [8, 0], sizes = [8, 32], strides = [1, 1]} : vector<16x32xf32> to vector<8x32xf32>
      %cst_62 = arith.constant dense<0.000000e+00> : vector<8x32xf32>
      %98 = tpu.matmul %96, %97, %cst_62 {dimension_numbers = #tpu.dot_dimension_numbers<[1], [0], [0], [1], [0, 0, 1, 1], [], []>} : vector<8x8xf32>, vector<8x32xf32>, vector<8x32xf32> -> vector<8x32xf32>
      %99 = arith.addf %95, %98 : vector<8x32xf32>
      %100 = vector.extract_strided_slice %26 {offsets = [8, 0], sizes = [8, 32], strides = [1, 1]} : vector<16x32xf32> to vector<8x32xf32>
      %101 = arith.addf %99, %100 : vector<8x32xf32>
      %c0_63 = arith.constant 0 : index
      %c0_64 = arith.constant 0 : index
      %102 = vector.load %arg9[%c0_63, %c0_64] : memref<1x32xf32, #tpu.memory_space<vmem>>, vector<1x32xf32>
      %c0_65 = arith.constant 0 : index
      %c0_66 = arith.constant 0 : index
      %103 = vector.load %arg10[%c0_65, %c0_66] : memref<1x32xf32, #tpu.memory_space<vmem>>, vector<1x32xf32>
      %cst_67 = arith.constant dense<0.000000e+00> : vector<8xf32>
      %104 = vector.multi_reduction <add>, %101, %cst_67 [1] : vector<8x32xf32> to vector<8xf32>
      %105 = vector.shape_cast %104 : vector<8xf32> to vector<8x1xf32>
      %cst_68 = arith.constant 3.200000e+01 : f32
      %106 = vector.broadcast %cst_68 : f32 to vector<8x1xf32>
      %107 = arith.divf %105, %106 : vector<8x1xf32>
      %108 = vector.broadcast %107 : vector<8x1xf32> to vector<8x32xf32>
      %109 = arith.subf %101, %108 : vector<8x32xf32>
      %110 = arith.mulf %109, %109 : vector<8x32xf32>
      %cst_69 = arith.constant dense<0.000000e+00> : vector<8xf32>
      %111 = vector.multi_reduction <add>, %110, %cst_69 [1] : vector<8x32xf32> to vector<8xf32>
      %112 = vector.shape_cast %111 : vector<8xf32> to vector<8x1xf32>
      %cst_70 = arith.constant 3.200000e+01 : f32
      %113 = vector.broadcast %cst_70 : f32 to vector<8x1xf32>
      %114 = arith.divf %112, %113 : vector<8x1xf32>
      %115 = vector.broadcast %107 : vector<8x1xf32> to vector<8x32xf32>
      %116 = arith.subf %101, %115 : vector<8x32xf32>
      %cst_71 = arith.constant 9.99999974E-6 : f32
      %117 = vector.broadcast %cst_71 : f32 to vector<8x1xf32>
      %118 = arith.addf %114, %117 : vector<8x1xf32>
      %119 = math.rsqrt %118 : vector<8x1xf32>
      %120 = vector.broadcast %119 : vector<8x1xf32> to vector<8x32xf32>
      %121 = arith.mulf %116, %120 : vector<8x32xf32>
      %122 = vector.broadcast %102 : vector<1x32xf32> to vector<8x32xf32>
      %123 = arith.mulf %121, %122 : vector<8x32xf32>
      %124 = vector.broadcast %103 : vector<1x32xf32> to vector<8x32xf32>
      %125 = arith.addf %123, %124 : vector<8x32xf32>
      %c8 = arith.constant 8 : index
      %c0_72 = arith.constant 0 : index
      %126 = vector.load %arg16[%c8, %c0_72] : memref<16x32xf32, #tpu.memory_space<vmem>>, vector<8x32xf32>
      tpu.vector_store %arg16[%c8, %c0_72], %125 {strides = array<i32>} : memref<16x32xf32, #tpu.memory_space<vmem>>, vector<8x32xf32>,
      %c0_73 = arith.constant 0 : index
      %c0_74 = arith.constant 0 : index
      %127 = vector.load %arg14[%c0_73, %c0_74] : memref<1x32xf32, #tpu.memory_space<vmem>>, vector<1x32xf32>
      %128 = vector.broadcast %127 : vector<1x32xf32> to vector<8x32xf32>
      %129 = arith.addf %101, %128 : vector<8x32xf32>
      %c8_75 = arith.constant 8 : index
      %c0_76 = arith.constant 0 : index
      %130 = vector.load %arg17[%c8_75, %c0_76] : memref<16x32xf32, #tpu.memory_space<vmem>>, vector<8x32xf32>
      tpu.vector_store %arg17[%c8_75, %c0_76], %129 {strides = array<i32>} : memref<16x32xf32, #tpu.memory_space<vmem>>, vector<8x32xf32>,
    } else {
    }
    %c0 = arith.constant 0 : index
    %c0_1 = arith.constant 0 : index
    %3 = vector.load %arg16[%c0, %c0_1] : memref<16x32xf32, #tpu.memory_space<vmem>>, vector<16x32xf32>
    %c0_2 = arith.constant 0 : index
    %c0_3 = arith.constant 0 : index
    %4 = vector.load %arg11[%c0_2, %c0_3] : memref<32x64xf32, #tpu.memory_space<vmem>>, vector<32x64xf32>
    %cst = arith.constant dense<0.000000e+00> : vector<16x64xf32>
    %5 = tpu.matmul %3, %4, %cst {dimension_numbers = #tpu.dot_dimension_numbers<[1], [0], [0], [1], [0, 0, 1, 1], [], []>} : vector<16x32xf32>, vector<32x64xf32>, vector<16x64xf32> -> vector<16x64xf32>
    %c0_4 = arith.constant 0 : index
    %c0_5 = arith.constant 0 : index
    %6 = vector.load %arg12[%c0_4, %c0_5] : memref<1x64xf32, #tpu.memory_space<vmem>>, vector<1x64xf32>
    %7 = vector.broadcast %6 : vector<1x64xf32> to vector<16x64xf32>
    %8 = arith.addf %5, %7 : vector<16x64xf32>
    %cst_6 = arith.constant 5.000000e-01 : f32
    %9 = vector.broadcast %cst_6 : f32 to vector<16x64xf32>
    %10 = arith.mulf %9, %8 : vector<16x64xf32>
    %cst_7 = arith.constant 0.707106769 : f32
    %11 = vector.broadcast %cst_7 : f32 to vector<16x64xf32>
    %12 = arith.mulf %8, %11 : vector<16x64xf32>
    %13 = math.erf %12 : vector<16x64xf32>
    %cst_8 = arith.constant 1.000000e+00 : f32
    %14 = vector.broadcast %cst_8 : f32 to vector<16x64xf32>
    %15 = arith.addf %14, %13 : vector<16x64xf32>
    %16 = arith.mulf %10, %15 : vector<16x64xf32>
    %c0_9 = arith.constant 0 : index
    %c0_10 = arith.constant 0 : index
    %17 = vector.load %arg17[%c0_9, %c0_10] : memref<16x32xf32, #tpu.memory_space<vmem>>, vector<16x32xf32>
    %c0_11 = arith.constant 0 : index
    %c0_12 = arith.constant 0 : index
    %18 = vector.load %arg13[%c0_11, %c0_12] : memref<64x32xf32, #tpu.memory_space<vmem>>, vector<64x32xf32>
    %cst_13 = arith.constant dense<0.000000e+00> : vector<16x32xf32>
    %19 = tpu.matmul %16, %18, %cst_13 {dimension_numbers = #tpu.dot_dimension_numbers<[1], [0], [0], [1], [0, 0, 1, 1], [], []>} : vector<16x64xf32>, vector<64x32xf32>, vector<16x32xf32> -> vector<16x32xf32>
    %20 = arith.addf %17, %19 : vector<16x32xf32>
    %c0_14 = arith.constant 0 : index
    %c0_15 = arith.constant 0 : index
    %21 = vector.load %arg17[%c0_14, %c0_15] : memref<16x32xf32, #tpu.memory_space<vmem>>, vector<16x32xf32>
    tpu.vector_store %arg17[%c0_14, %c0_15], %20 {strides = array<i32>} : memref<16x32xf32, #tpu.memory_space<vmem>>, vector<16x32xf32>,
    %c0_i32_16 = arith.constant 0 : i32
    %22 = arith.cmpi eq, %arg1, %c0_i32_16 : i32
    %23 = arith.extui %22 : i1 to i32
    %c0_i32_17 = arith.constant 0 : i32
    %24 = arith.cmpi ne, %23, %c0_i32_17 : i32
    scf.if %24 {
      %c0_18 = arith.constant 0 : index
      %c0_19 = arith.constant 0 : index
      %25 = vector.load %arg17[%c0_18, %c0_19] : memref<16x32xf32, #tpu.memory_space<vmem>>, vector<16x32xf32>
      %26 = vector.shape_cast %25 : vector<16x32xf32> to vector<2x8x32xf32>
      %c0_20 = arith.constant 0 : index
      %c0_21 = arith.constant 0 : index
      %c0_22 = arith.constant 0 : index
      %27 = vector.load %arg15[%c0_20, %c0_21, %c0_22] : memref<2x8x32xf32, #tpu.memory_space<vmem>>, vector<2x8x32xf32>
      tpu.vector_store %arg15[%c0_20, %c0_21, %c0_22], %26 {strides = array<i32>} : memref<2x8x32xf32, #tpu.memory_space<vmem>>, vector<2x8x32xf32>,
    } else {
    }
    return
  }
  func.func @transform_0(%arg0: i32, %arg1: i32) -> (i32, i32, i32) {
    %c0_i32 = arith.constant 0 : i32
    %c0_i32_0 = arith.constant 0 : i32
    %c0_i32_1 = arith.constant 0 : i32
    return %arg0, %c0_i32, %c0_i32_0 : i32, i32, i32
  }
  func.func @transform_1(%arg0: i32, %arg1: i32) -> (i32, i32) {
    %c0_i32 = arith.constant 0 : i32
    %c0_i32_0 = arith.constant 0 : i32
    %c0_i32_1 = arith.constant 0 : i32
    return %c0_i32, %c0_i32_0 : i32, i32
  }
  func.func @transform_2(%arg0: i32, %arg1: i32) -> (i32, i32) {
    %c0_i32 = arith.constant 0 : i32
    %c0_i32_0 = arith.constant 0 : i32
    %c0_i32_1 = arith.constant 0 : i32
    return %c0_i32, %c0_i32_0 : i32, i32
  }
  func.func @transform_3(%arg0: i32, %arg1: i32) -> (i32, i32) {
    %c0_i32 = arith.constant 0 : i32
    %c0_i32_0 = arith.constant 0 : i32
    %c0_i32_1 = arith.constant 0 : i32
    return %c0_i32, %c0_i32_0 : i32, i32
  }
  func.func @transform_4(%arg0: i32, %arg1: i32) -> (i32, i32) {
    %c0_i32 = arith.constant 0 : i32
    %c0_i32_0 = arith.constant 0 : i32
    %c0_i32_1 = arith.constant 0 : i32
    return %c0_i32, %c0_i32_0 : i32, i32
  }
  func.func @transform_5(%arg0: i32, %arg1: i32) -> (i32, i32) {
    %c0_i32 = arith.constant 0 : i32
    %c0_i32_0 = arith.constant 0 : i32
    %c0_i32_1 = arith.constant 0 : i32
    return %c0_i32, %c0_i32_0 : i32, i32
  }
  func.func @transform_6(%arg0: i32, %arg1: i32) -> (i32, i32) {
    %c0_i32 = arith.constant 0 : i32
    %c0_i32_0 = arith.constant 0 : i32
    %c0_i32_1 = arith.constant 0 : i32
    return %c0_i32, %c0_i32_0 : i32, i32
  }
  func.func @transform_7(%arg0: i32, %arg1: i32) -> (i32, i32) {
    %c0_i32 = arith.constant 0 : i32
    %c0_i32_0 = arith.constant 0 : i32
    %c0_i32_1 = arith.constant 0 : i32
    return %c0_i32, %c0_i32_0 : i32, i32
  }
  func.func @transform_8(%arg0: i32, %arg1: i32) -> (i32, i32) {
    %c0_i32 = arith.constant 0 : i32
    %c0_i32_0 = arith.constant 0 : i32
    %c0_i32_1 = arith.constant 0 : i32
    return %c0_i32, %c0_i32_0 : i32, i32
  }
  func.func @transform_9(%arg0: i32, %arg1: i32) -> (i32, i32) {
    %c0_i32 = arith.constant 0 : i32
    %c0_i32_0 = arith.constant 0 : i32
    return %c0_i32, %arg1 : i32, i32
  }
  func.func @transform_10(%arg0: i32, %arg1: i32) -> (i32, i32) {
    %c0_i32 = arith.constant 0 : i32
    %c0_i32_0 = arith.constant 0 : i32
    return %c0_i32, %arg1 : i32, i32
  }
  func.func @transform_11(%arg0: i32, %arg1: i32) -> (i32, i32) {
    %c0_i32 = arith.constant 0 : i32
    %c0_i32_0 = arith.constant 0 : i32
    return %arg1, %c0_i32 : i32, i32
  }
  func.func @transform_12(%arg0: i32, %arg1: i32) -> (i32, i32) {
    %c0_i32 = arith.constant 0 : i32
    %c0_i32_0 = arith.constant 0 : i32
    %c0_i32_1 = arith.constant 0 : i32
    return %c0_i32, %c0_i32_0 : i32, i32
  }
  func.func @transform_13(%arg0: i32, %arg1: i32) -> (i32, i32, i32) {
    %c0_i32 = arith.constant 0 : i32
    %c0_i32_0 = arith.constant 0 : i32
    %c0_i32_1 = arith.constant 0 : i32
    return %arg0, %c0_i32, %c0_i32_0 : i32, i32, i32
  }
}

</mosaic_0001>

<llo_original>
// kernel: tpu_custom_call.1
$region0: #{tpu_custom_call.1}
  #allocation0 [shape = 'u32[]', space=smem, size = 0x4, offset = 0x4, fixed_abs, tag = 'smem constant byte address 0x4 - core index']
  #allocation1 [shape = 'u32[144,128]{1,0:T(1,128)}', space=vmem, size = 0x12000, scoped, tag = 'internal scratch']
  #allocation2 [shape = 'f32[16,32]{1,0:T(8,128)}', space=vmem, size = 0x2000, scoped, tag = 'scratch operand']
  #allocation3 [shape = 'f32[16,32]{1,0:T(8,128)}', space=vmem, size = 0x2000, scoped, tag = 'scratch operand']
  %s0 = inlined_call_operand.hbm [shape: f32[2,8,32], index: 0, kind: input, shape index: {}]
  %s1 = inlined_call_operand.vmem [shape: f32[32,32], index: 1, kind: input, shape index: {}]
  %s2 = inlined_call_operand.vmem [shape: f32[32,32], index: 2, kind: input, shape index: {}]
  %s3 = inlined_call_operand.hbm [shape: f32[8,8], index: 3, kind: input, shape index: {}]
  %s4 = inlined_call_operand.hbm [shape: f32[8,8], index: 4, kind: input, shape index: {}]
  %s5 = inlined_call_operand.vmem [shape: f32[1,32], index: 5, kind: input, shape index: {}]
  %s6 = inlined_call_operand.vmem [shape: f32[1,32], index: 6, kind: input, shape index: {}]
  %s7 = inlined_call_operand.vmem [shape: f32[1,32], index: 7, kind: input, shape index: {}]
  %s8 = inlined_call_operand.vmem [shape: f32[1,32], index: 8, kind: input, shape index: {}]
  %s9 = inlined_call_operand.vmem [shape: f32[32,64], index: 9, kind: input, shape index: {}]
  %s10 = inlined_call_operand.vmem [shape: f32[1,64], index: 10, kind: input, shape index: {}]
  %s11 = inlined_call_operand.vmem [shape: f32[64,32], index: 11, kind: input, shape index: {}]
  %s12 = inlined_call_operand.vmem [shape: f32[1,32], index: 12, kind: input, shape index: {}]
  %s13 = inlined_call_operand.hbm [shape: f32[2,8,32], index: 13, kind: output, shape index: {}]
  %s14 = sld [smem:[#allocation0]]
  $region82: #{tpu_custom_call.1} parent=0
    _
  %s16 = ssub.s32 1, %s14
  %s17 = scalar_select 0, %s16, %s14
  $region1: #{tpu_custom_call.1} parent=0
    #allocation4 [shape = 'u8[8192]{0}', space=vmem, size = 0x2000, scoped, tag = 'input window, operand 0, single buffered']
    #allocation5 [shape = 's32[1]{0}', space=sflag, size = 0x4, scoped, tag = 'scoped memory for tpu_custom_call.1']
    #allocation6 [shape = 's32[1]{0}', space=sflag, size = 0x4, scoped, tag = 'scoped memory for tpu_custom_call.1']
    #allocation7 [shape = 'u8[4096]{0}', space=vmem, size = 0x1000, scoped, tag = 'input window, operand 3, single buffered']
    #allocation8 [shape = 's32[1]{0}', space=sflag, size = 0x4, scoped, tag = 'scoped memory for tpu_custom_call.1']
    #allocation9 [shape = 'u8[4096]{0}', space=vmem, size = 0x1000, scoped, tag = 'input window, operand 4, single buffered']
    #allocation10 [shape = 'u8[8192]{0}', space=vmem, size = 0x2000, scoped, tag = 'output window, operand 0, single buffered']
    %18 = vsyncpa [#allocation5], 0
    %19 = vsyncpa [#allocation8], 0
    %20 = vsyncpa [#allocation6], 0
    // Predicated region
    $region2: #{tpu_custom_call.1} parent=1 // pred_check
      _
    $region3: #{tpu_custom_call.1} parent=1 // pred_check_branch
      %22 = sbr.rel (0) target = $region5
    $region4: #{tpu_custom_call.1} parent=1 // pred_region
      %s24 = ssub.s32 256, 256
      %25 = vsyncadd [#allocation5], %s24
      %s26 = sshll.u32 [#allocation4], 4
      %s27 = int_to_ptr.vmem [resolvable:$true] %s26
      %32 = dma.hbm_to_vmem [thread:$0]  %s0, 256, %s27, [#allocation5], 128, 128, 8
    $region5: #{tpu_custom_call.1} parent=1 // pred_fallthru
      _
    // Predicated region
    $region6: #{tpu_custom_call.1} parent=1 // pred_check
      _
    $region7: #{tpu_custom_call.1} parent=1 // pred_check_branch
      %34 = sbr.rel (0) target = $region9
    $region8: #{tpu_custom_call.1} parent=1 // pred_region
      _
    $region9: #{tpu_custom_call.1} parent=1 // pred_fallthru
      _
    // Predicated region
    $region10: #{tpu_custom_call.1} parent=1 // pred_check
      _
    $region11: #{tpu_custom_call.1} parent=1 // pred_check_branch
      %36 = sbr.rel (0) target = $region13
    $region12: #{tpu_custom_call.1} parent=1 // pred_region
      _
    $region13: #{tpu_custom_call.1} parent=1 // pred_fallthru
      _
    // Predicated region
    $region14: #{tpu_custom_call.1} parent=1 // pred_check
      _
    $region15: #{tpu_custom_call.1} parent=1 // pred_check_branch
      %38 = sbr.rel (0) target = $region17
    $region16: #{tpu_custom_call.1} parent=1 // pred_region
      %s40 = ssub.s32 128, 128
      %41 = vsyncadd [#allocation8], %s40
      %s43 = sshll.u32 [#allocation7], 4
      %s44 = int_to_ptr.vmem [resolvable:$true] %s43
      %46 = dma.hbm_to_vmem [thread:$0]  %s3, 128, %s44, [#allocation8]
    $region17: #{tpu_custom_call.1} parent=1 // pred_fallthru
      _
    // Predicated region
    $region18: #{tpu_custom_call.1} parent=1 // pred_check
      _
    $region19: #{tpu_custom_call.1} parent=1 // pred_check_branch
      %48 = sbr.rel (0) target = $region21
    $region20: #{tpu_custom_call.1} parent=1 // pred_region
      %s50 = ssub.s32 128, 128
      %51 = vsyncadd [#allocation8], %s50
      %s53 = sshll.u32 [#allocation9], 4
      %s54 = int_to_ptr.vmem [resolvable:$true] %s53
      %56 = dma.hbm_to_vmem [thread:$0]  %s4, 128, %s54, [#allocation8]
    $region21: #{tpu_custom_call.1} parent=1 // pred_fallthru
      _
    // Predicated region
    $region22: #{tpu_custom_call.1} parent=1 // pred_check
      _
    $region23: #{tpu_custom_call.1} parent=1 // pred_check_branch
      %58 = sbr.rel (0) target = $region25
    $region24: #{tpu_custom_call.1} parent=1 // pred_region
      _
    $region25: #{tpu_custom_call.1} parent=1 // pred_fallthru
      _
    // Predicated region
    $region26: #{tpu_custom_call.1} parent=1 // pred_check
      _
    $region27: #{tpu_custom_call.1} parent=1 // pred_check_branch
      %60 = sbr.rel (0) target = $region29
    $region28: #{tpu_custom_call.1} parent=1 // pred_region
      _
    $region29: #{tpu_custom_call.1} parent=1 // pred_fallthru
      _
    // Predicated region
    $region30: #{tpu_custom_call.1} parent=1 // pred_check
      _
    $region31: #{tpu_custom_call.1} parent=1 // pred_check_branch
      %62 = sbr.rel (0) target = $region33
    $region32: #{tpu_custom_call.1} parent=1 // pred_region
      _
    $region33: #{tpu_custom_call.1} parent=1 // pred_fallthru
      _
    // Predicated region
    $region34: #{tpu_custom_call.1} parent=1 // pred_check
      _
    $region35: #{tpu_custom_call.1} parent=1 // pred_check_branch
      %64 = sbr.rel (0) target = $region37
    $region36: #{tpu_custom_call.1} parent=1 // pred_region
      _
    $region37: #{tpu_custom_call.1} parent=1 // pred_fallthru
      _
    // Predicated region
    $region38: #{tpu_custom_call.1} parent=1 // pred_check
      _
    $region39: #{tpu_custom_call.1} parent=1 // pred_check_branch
      %66 = sbr.rel (0) target = $region41
    $region40: #{tpu_custom_call.1} parent=1 // pred_region
      _
    $region41: #{tpu_custom_call.1} parent=1 // pred_fallthru
      _
    // Predicated region
    $region42: #{tpu_custom_call.1} parent=1 // pred_check
      _
    $region43: #{tpu_custom_call.1} parent=1 // pred_check_branch
      %68 = sbr.rel (0) target = $region45
    $region44: #{tpu_custom_call.1} parent=1 // pred_region
      _
    $region45: #{tpu_custom_call.1} parent=1 // pred_fallthru
      _
    // Predicated region
    $region46: #{tpu_custom_call.1} parent=1 // pred_check
      _
    $region47: #{tpu_custom_call.1} parent=1 // pred_check_branch
      %70 = sbr.rel (0) target = $region49
    $region48: #{tpu_custom_call.1} parent=1 // pred_region
      _
    $region49: #{tpu_custom_call.1} parent=1 // pred_fallthru
      _
    // Predicated region
    $region50: #{tpu_custom_call.1} parent=1 // pred_check
      _
    $region51: #{tpu_custom_call.1} parent=1 // pred_check_branch
      %72 = sbr.rel (0) target = $region53
    $region52: #{tpu_custom_call.1} parent=1 // pred_region
      _
    $region53: #{tpu_custom_call.1} parent=1 // pred_fallthru
      _
    // Predicated region
    $region54: #{tpu_custom_call.1} parent=1 // pred_check
      _
    $region55: #{tpu_custom_call.1} parent=1 // pred_check_branch
      %74 = sbr.rel (0) target = $region57
    $region56: #{tpu_custom_call.1} parent=1 // pred_region
      %75 = dma.done [#allocation5], 256
    $region57: #{tpu_custom_call.1} parent=1 // pred_fallthru
      _
    // Predicated region
    $region58: #{tpu_custom_call.1} parent=1 // pred_check
      _
    $region59: #{tpu_custom_call.1} parent=1 // pred_check_branch
      %77 = sbr.rel (0) target = $region61
    $region60: #{tpu_custom_call.1} parent=1 // pred_region
      %78 = dma.done [#allocation8], 128
    $region61: #{tpu_custom_call.1} parent=1 // pred_fallthru
      _
    // Predicated region
    $region62: #{tpu_custom_call.1} parent=1 // pred_check
      _
    $region63: #{tpu_custom_call.1} parent=1 // pred_check_branch
      %80 = sbr.rel (0) target = $region65
    $region64: #{tpu_custom_call.1} parent=1 // pred_region
      %81 = dma.done [#allocation8], 128
    $region65: #{tpu_custom_call.1} parent=1 // pred_fallthru
      _
    %p82 = scmp.eq.s32.totalorder 0, 0
    // Predicated region
    $region66: #{tpu_custom_call.1} parent=1 // pred_check
      %p83 = pneg %p82
    $region67: #{tpu_custom_call.1} parent=1 // pred_check_branch
      %85 = sbr.rel (%p83) target = $region69
    $region68: #{tpu_custom_call.1} parent=1 // pred_region
      %v86 = vld [vmem:[#allocation4] sm:$0xff]
      %v87 = vld [vmem:[#allocation4 + $0x8] sm:$0xff]
      %v88 = vld [vmem:[%s5] sm:$0x1]
      %v89 = vld [vmem:[%s6] sm:$0x1]
      %vm90 = vcmask 261120
      %v91 = vsel %vm90, %v86, 0.0
      %92 = vadd.xlane.f32.xlu0 %v91
      %v93 = vpop.xlane.xlu0 %92
      %v94 = vsel %vm90, %v87, 0.0
      %95 = vadd.xlane.f32.xlu0 %v94
      %v96 = vpop.xlane.xlu0 %95
      %v97 = vrcp.pop 32.0
      %v98 = vmul.f32 %v93, %v97
      %v99 = vmul.f32 %v96, %v97
      %v100 = vsub.f32 %v86, %v98
      %v101 = vsub.f32 %v87, %v99
      %v102 = vmul.f32 %v100, %v100
      %v103 = vmul.f32 %v101, %v101
      %v104 = vsel %vm90, %v102, 0.0
      %105 = vadd.xlane.f32.xlu0 %v104
      %v106 = vpop.xlane.xlu0 %105
      %v107 = vsel %vm90, %v103, 0.0
      %108 = vadd.xlane.f32.xlu0 %v107
      %v109 = vpop.xlane.xlu0 %108
      %v110 = vmul.f32 %v106, %v97
      %v111 = vmul.f32 %v109, %v97
      %v112 = vadd.f32 %v110, 1e-05
      %v113 = vadd.f32 %v111, 1e-05
      %v114 = vrsqrt.pop %v112
      %v115 = vrsqrt.pop %v113
      %v116 = vmul.f32 %v100, %v114
      %v117 = vmul.f32 %v101, %v115
      %v119 = vlaneseq
      %v120 = vshrl.u32 %v119, 7
      %v121 = vsub.s32 0, %v120
      %v122 = vrot.slane %v88, %v121
      %v124 = vmul.f32 %v116, %v122
      %v125 = vmul.f32 %v117, %v122
      %v127 = vlaneseq
      %v128 = vshrl.u32 %v127, 7
      %v129 = vsub.s32 0, %v128
      %v130 = vrot.slane %v89, %v129
      %v132 = vadd.f32 %v124, %v130
      %v133 = vadd.f32 %v125, %v130
      %v134 = vld [vmem:[%s1] sm:$0xff]
      %v135 = vld [vmem:[%s1 + $0x8] sm:$0xff]
      %v136 = vld [vmem:[%s1 + $0x10] sm:$0xff]
      %v137 = vld [vmem:[%s1 + $0x18] sm:$0xff]
      %v139 = vsel %vm90, %v132, 0
      %v142 = vsel %vm90, %v133, 0
      %144 = vmatprep.subr.mxu0 0.0
      %145 = vmatpush1.msra.mxu0 0.0
      %146 = vmatprep.subr.mxu0 0.0
      %147 = vmatpush1.msra.mxu0 0.0
      %148 = vmatprep.subr.mxu0 0.0
      %149 = vmatpush1.msra.mxu0 0.0
      %150 = vmatprep.subr.mxu0 0.0
      %151 = vmatpush1.msra.mxu0 0.0
      %152 = vmatprep.subr.mxu0 0.0
      %153 = vmatpush1.msra.mxu0 0.0
      %154 = vmatprep.subr.mxu0 0.0
      %155 = vmatpush1.msra.mxu0 0.0
      %156 = vmatprep.subr.mxu0 0.0
      %157 = vmatpush1.msra.mxu0 0.0
      %158 = vmatprep.subr.mxu0 0.0
      %159 = vmatpush1.msra.mxu0 0.0
      %160 = vmatprep.subr.mxu0 0.0
      %161 = vmatpush1.msra.mxu0 0.0
      %162 = vmatprep.subr.mxu0 0.0
      %163 = vmatpush1.msra.mxu0 0.0
      %164 = vmatprep.subr.mxu0 0.0
      %165 = vmatpush1.msra.mxu0 0.0
      %166 = vmatprep.subr.mxu0 0.0
      %167 = vmatpush1.msra.mxu0 0.0
      %168 = vmatprep.subr.mxu0 0.0
      %169 = vmatpush1.msra.mxu0 %v137
      %170 = vmatprep.subr.mxu0 0.0
      %171 = vmatpush1.msra.mxu0 %v136
      %172 = vmatprep.subr.mxu0 0.0
      %173 = vmatpush1.msra.mxu0 %v135
      %174 = vmatprep.subr.mxu0 0.0
      %175 = vmatpush1.msra.mxu0 %v134
      %176 = vmatprep.subr.mxu0 0.0
      %177 = vmatpush2.msra.mxu0 0.0
      %178 = vmatprep.subr.mxu0 0.0
      %179 = vmatpush2.msra.mxu0 0.0
      %180 = vmatprep.subr.mxu0 0.0
      %181 = vmatpush2.msra.mxu0 0.0
      %182 = vmatprep.subr.mxu0 0.0
      %183 = vmatpush2.msra.mxu0 0.0
      %184 = vmatprep.subr.mxu0 0.0
      %185 = vmatpush2.msra.mxu0 0.0
      %186 = vmatprep.subr.mxu0 0.0
      %187 = vmatpush2.msra.mxu0 0.0
      %188 = vmatprep.subr.mxu0 0.0
      %189 = vmatpush2.msra.mxu0 0.0
      %190 = vmatprep.subr.mxu0 0.0
      %191 = vmatpush2.msra.mxu0 0.0
      %192 = vmatprep.subr.mxu0 0.0
      %193 = vmatpush2.msra.mxu0 0.0
      %194 = vmatprep.subr.mxu0 0.0
      %195 = vmatpush2.msra.mxu0 0.0
      %196 = vmatprep.subr.mxu0 0.0
      %197 = vmatpush2.msra.mxu0 0.0
      %198 = vmatprep.subr.mxu0 0.0
      %199 = vmatpush2.msra.mxu0 0.0
      %200 = vmatprep.subr.mxu0 0.0
      %201 = vmatpush2.msra.mxu0 0.0
      %202 = vmatprep.subr.mxu0 0.0
      %203 = vmatpush2.msra.mxu0 0.0
      %204 = vmatprep.subr.mxu0 0.0
      %205 = vmatpush2.msra.mxu0 0.0
      %206 = vmatprep.subr.mxu0 0.0
      %207 = vmatpush2.msra.mxu0 0.0
      %208 = vmatprep.mubr.f32.mxu0 0.0
      %209 = vmatmul.mubr.f32.gmra.mxu0 %v139
      %v210 = vpop.f32.mrf.mxu0
      %v211 = vadd.f32 0.0, %v210
      %v212 = vpop.f32.mrf.mxu0
      %213 = vmatprep.mubr.f32.mxu0 0.0
      %214 = vmatmul.mubr.f32.gmra.mxu0 %v142
      %v215 = vpop.f32.mrf.mxu0
      %v216 = vadd.f32 0.0, %v215
      %v217 = vpop.f32.mrf.mxu0
      %218 = vdwg.mxu0
      %v219 = vld [vmem:[%s2] sm:$0xff]
      %v220 = vld [vmem:[%s2 + $0x8] sm:$0xff]
      %v221 = vld [vmem:[%s2 + $0x10] sm:$0xff]
      %v222 = vld [vmem:[%s2 + $0x18] sm:$0xff]
      %223 = vmatprep.subr.mxu0 0.0
      %224 = vmatpush1.msra.mxu0 0.0
      %225 = vmatprep.subr.mxu0 0.0
      %226 = vmatpush1.msra.mxu0 0.0
      %227 = vmatprep.subr.mxu0 0.0
      %228 = vmatpush1.msra.mxu0 0.0
      %229 = vmatprep.subr.mxu0 0.0
      %230 = vmatpush1.msra.mxu0 0.0
      %231 = vmatprep.subr.mxu0 0.0
      %232 = vmatpush1.msra.mxu0 0.0
      %233 = vmatprep.subr.mxu0 0.0
      %234 = vmatpush1.msra.mxu0 0.0
      %235 = vmatprep.subr.mxu0 0.0
      %236 = vmatpush1.msra.mxu0 0.0
      %237 = vmatprep.subr.mxu0 0.0
      %238 = vmatpush1.msra.mxu0 0.0
      %239 = vmatprep.subr.mxu0 0.0
      %240 = vmatpush1.msra.mxu0 0.0
      %241 = vmatprep.subr.mxu0 0.0
      %242 = vmatpush1.msra.mxu0 0.0
      %243 = vmatprep.subr.mxu0 0.0
      %244 = vmatpush1.msra.mxu0 0.0
      %245 = vmatprep.subr.mxu0 0.0
      %246 = vmatpush1.msra.mxu0 0.0
      %247 = vmatprep.subr.mxu0 0.0
      %248 = vmatpush1.msra.mxu0 %v222
      %249 = vmatprep.subr.mxu0 0.0
      %250 = vmatpush1.msra.mxu0 %v221
      %251 = vmatprep.subr.mxu0 0.0
      %252 = vmatpush1.msra.mxu0 %v220
      %253 = vmatprep.subr.mxu0 0.0
      %254 = vmatpush1.msra.mxu0 %v219
      %255 = vmatprep.subr.mxu0 0.0
      %256 = vmatpush2.msra.mxu0 0.0
      %257 = vmatprep.subr.mxu0 0.0
      %258 = vmatpush2.msra.mxu0 0.0
      %259 = vmatprep.subr.mxu0 0.0
      %260 = vmatpush2.msra.mxu0 0.0
      %261 = vmatprep.subr.mxu0 0.0
      %262 = vmatpush2.msra.mxu0 0.0
      %263 = vmatprep.subr.mxu0 0.0
      %264 = vmatpush2.msra.mxu0 0.0
      %265 = vmatprep.subr.mxu0 0.0
      %266 = vmatpush2.msra.mxu0 0.0
      %267 = vmatprep.subr.mxu0 0.0
      %268 = vmatpush2.msra.mxu0 0.0
      %269 = vmatprep.subr.mxu0 0.0
      %270 = vmatpush2.msra.mxu0 0.0
      %271 = vmatprep.subr.mxu0 0.0
      %272 = vmatpush2.msra.mxu0 0.0
      %273 = vmatprep.subr.mxu0 0.0
      %274 = vmatpush2.msra.mxu0 0.0
      %275 = vmatprep.subr.mxu0 0.0
      %276 = vmatpush2.msra.mxu0 0.0
      %277 = vmatprep.subr.mxu0 0.0
      %278 = vmatpush2.msra.mxu0 0.0
      %279 = vmatprep.subr.mxu0 0.0
      %280 = vmatpush2.msra.mxu0 0.0
      %281 = vmatprep.subr.mxu0 0.0
      %282 = vmatpush2.msra.mxu0 0.0
      %283 = vmatprep.subr.mxu0 0.0
      %284 = vmatpush2.msra.mxu0 0.0
      %285 = vmatprep.subr.mxu0 0.0
      %286 = vmatpush2.msra.mxu0 0.0
      %287 = vmatprep.mubr.f32.mxu0 0.0
      %288 = vmatmul.mubr.f32.gmra.mxu0 %v139
      %v289 = vpop.f32.mrf.mxu0
      %v290 = vadd.f32 0.0, %v289
      %v291 = vpop.f32.mrf.mxu0
      %292 = vmatprep.mubr.f32.mxu0 0.0
      %293 = vmatmul.mubr.f32.gmra.mxu0 %v142
      %v294 = vpop.f32.mrf.mxu0
      %v295 = vadd.f32 0.0, %v294
      %v296 = vpop.f32.mrf.mxu0
      %297 = vdwg.mxu0
      %v298 = vld [vmem:[#allocation7] sm:$0xff]
      %v299 = vld [vmem:[#allocation9] sm:$0xff]
      %vm300 = vcmask 64512
      %v302 = vsel %vm300, %v299, 0
      %304 = vmatprep.subr.mxu0 0.0
      %305 = vmatpush1.msra.mxu0 0.0
      %306 = vmatprep.subr.mxu0 0.0
      %307 = vmatpush1.msra.mxu0 0.0
      %308 = vmatprep.subr.mxu0 0.0
      %309 = vmatpush1.msra.mxu0 0.0
      %310 = vmatprep.subr.mxu0 0.0
      %311 = vmatpush1.msra.mxu0 0.0
      %312 = vmatprep.subr.mxu0 0.0
      %313 = vmatpush1.msra.mxu0 0.0
      %314 = vmatprep.subr.mxu0 0.0
      %315 = vmatpush1.msra.mxu0 0.0
      %316 = vmatprep.subr.mxu0 0.0
      %317 = vmatpush1.msra.mxu0 0.0
      %318 = vmatprep.subr.mxu0 0.0
      %319 = vmatpush1.msra.mxu0 0.0
      %320 = vmatprep.subr.mxu0 0.0
      %321 = vmatpush1.msra.mxu0 0.0
      %322 = vmatprep.subr.mxu0 0.0
      %323 = vmatpush1.msra.mxu0 0.0
      %324 = vmatprep.subr.mxu0 0.0
      %325 = vmatpush1.msra.mxu0 0.0
      %326 = vmatprep.subr.mxu0 0.0
      %327 = vmatpush1.msra.mxu0 0.0
      %328 = vmatprep.subr.mxu0 0.0
      %329 = vmatpush1.msra.mxu0 0.0
      %330 = vmatprep.subr.mxu0 0.0
      %331 = vmatpush1.msra.mxu0 0.0
      %332 = vmatprep.subr.mxu0 0.0
      %333 = vmatpush1.msra.mxu0 0.0
      %334 = vmatprep.subr.mxu0 0.0
      %335 = vmatpush1.msra.mxu0 %v290
      %336 = vmatprep.subr.mxu0 0.0
      %337 = vmatpush2.msra.mxu0 0.0
      %338 = vmatprep.subr.mxu0 0.0
      %339 = vmatpush2.msra.mxu0 0.0
      %340 = vmatprep.subr.mxu0 0.0
      %341 = vmatpush2.msra.mxu0 0.0
      %342 = vmatprep.subr.mxu0 0.0
      %343 = vmatpush2.msra.mxu0 0.0
      %344 = vmatprep.subr.mxu0 0.0
      %345 = vmatpush2.msra.mxu0 0.0
      %346 = vmatprep.subr.mxu0 0.0
      %347 = vmatpush2.msra.mxu0 0.0
      %348 = vmatprep.subr.mxu0 0.0
      %349 = vmatpush2.msra.mxu0 0.0
      %350 = vmatprep.subr.mxu0 0.0
      %351 = vmatpush2.msra.mxu0 0.0
      %352 = vmatprep.subr.mxu0 0.0
      %353 = vmatpush2.msra.mxu0 0.0
      %354 = vmatprep.subr.mxu0 0.0
      %355 = vmatpush2.msra.mxu0 0.0
      %356 = vmatprep.subr.mxu0 0.0
      %357 = vmatpush2.msra.mxu0 0.0
      %358 = vmatprep.subr.mxu0 0.0
      %359 = vmatpush2.msra.mxu0 0.0
      %360 = vmatprep.subr.mxu0 0.0
      %361 = vmatpush2.msra.mxu0 0.0
      %362 = vmatprep.subr.mxu0 0.0
      %363 = vmatpush2.msra.mxu0 0.0
      %364 = vmatprep.subr.mxu0 0.0
      %365 = vmatpush2.msra.mxu0 0.0
      %366 = vmatprep.subr.mxu0 0.0
      %367 = vmatpush2.msra.mxu0 0.0
      %368 = vmatprep.mubr.f32.mxu0 0.0
      %369 = vmatmul.mubr.f32.gmra.mxu0 %v302
      %v370 = vpop.f32.mrf.mxu0
      %v371 = vadd.f32 0.0, %v370
      %v372 = vpop.f32.mrf.mxu0
      %373 = vdwg.mxu0
      %v375 = vsel %vm300, %v298, 0
      %377 = vmatprep.subr.mxu0 0.0
      %378 = vmatpush1.msra.mxu0 0.0
      %379 = vmatprep.subr.mxu0 0.0
      %380 = vmatpush1.msra.mxu0 0.0
      %381 = vmatprep.subr.mxu0 0.0
      %382 = vmatpush1.msra.mxu0 0.0
      %383 = vmatprep.subr.mxu0 0.0
      %384 = vmatpush1.msra.mxu0 0.0
      %385 = vmatprep.subr.mxu0 0.0
      %386 = vmatpush1.msra.mxu0 0.0
      %387 = vmatprep.subr.mxu0 0.0
      %388 = vmatpush1.msra.mxu0 0.0
      %389 = vmatprep.subr.mxu0 0.0
      %390 = vmatpush1.msra.mxu0 0.0
      %391 = vmatprep.subr.mxu0 0.0
      %392 = vmatpush1.msra.mxu0 0.0
      %393 = vmatprep.subr.mxu0 0.0
      %394 = vmatpush1.msra.mxu0 0.0
      %395 = vmatprep.subr.mxu0 0.0
      %396 = vmatpush1.msra.mxu0 0.0
      %397 = vmatprep.subr.mxu0 0.0
      %398 = vmatpush1.msra.mxu0 0.0
      %399 = vmatprep.subr.mxu0 0.0
      %400 = vmatpush1.msra.mxu0 0.0
      %401 = vmatprep.subr.mxu0 0.0
      %402 = vmatpush1.msra.mxu0 0.0
      %403 = vmatprep.subr.mxu0 0.0
      %404 = vmatpush1.msra.mxu0 0.0
      %405 = vmatprep.subr.mxu0 0.0
      %406 = vmatpush1.msra.mxu0 0.0
      %407 = vmatprep.subr.mxu0 0.0
      %408 = vmatpush1.msra.mxu0 %v211
      %409 = vmatprep.subr.mxu0 0.0
      %410 = vmatpush2.msra.mxu0 0.0
      %411 = vmatprep.subr.mxu0 0.0
      %412 = vmatpush2.msra.mxu0 0.0
      %413 = vmatprep.subr.mxu0 0.0
      %414 = vmatpush2.msra.mxu0 0.0
      %415 = vmatprep.subr.mxu0 0.0
      %416 = vmatpush2.msra.mxu0 0.0
      %417 = vmatprep.subr.mxu0 0.0
      %418 = vmatpush2.msra.mxu0 0.0
      %419 = vmatprep.subr.mxu0 0.0
      %420 = vmatpush2.msra.mxu0 0.0
      %421 = vmatprep.subr.mxu0 0.0
      %422 = vmatpush2.msra.mxu0 0.0
      %423 = vmatprep.subr.mxu0 0.0
      %424 = vmatpush2.msra.mxu0 0.0
      %425 = vmatprep.subr.mxu0 0.0
      %426 = vmatpush2.msra.mxu0 0.0
      %427 = vmatprep.subr.mxu0 0.0
      %428 = vmatpush2.msra.mxu0 0.0
      %429 = vmatprep.subr.mxu0 0.0
      %430 = vmatpush2.msra.mxu0 0.0
      %431 = vmatprep.subr.mxu0 0.0
      %432 = vmatpush2.msra.mxu0 0.0
      %433 = vmatprep.subr.mxu0 0.0
      %434 = vmatpush2.msra.mxu0 0.0
      %435 = vmatprep.subr.mxu0 0.0
      %436 = vmatpush2.msra.mxu0 0.0
      %437 = vmatprep.subr.mxu0 0.0
      %438 = vmatpush2.msra.mxu0 0.0
      %439 = vmatprep.subr.mxu0 0.0
      %440 = vmatpush2.msra.mxu0 0.0
      %441 = vmatprep.mubr.f32.mxu0 0.0
      %442 = vmatmul.mubr.f32.gmra.mxu0 %v375
      %v443 = vpop.f32.mrf.mxu0
      %v444 = vadd.f32 %v371, %v443
      %v445 = vpop.f32.mrf.mxu0
      %446 = vdwg.mxu0
      %v447 = vadd.f32 %v444, %v86
      %v448 = vld [vmem:[%s7] sm:$0x1]
      %v449 = vld [vmem:[%s8] sm:$0x1]
      %v450 = vsel %vm90, %v447, 0.0
      %451 = vadd.xlane.f32.xlu0 %v450
      %v452 = vpop.xlane.xlu0 %451
      %v453 = vmul.f32 %v452, %v97
      %v454 = vsub.f32 %v447, %v453
      %v455 = vmul.f32 %v454, %v454
      %v456 = vsel %vm90, %v455, 0.0
      %457 = vadd.xlane.f32.xlu0 %v456
      %v458 = vpop.xlane.xlu0 %457
      %v459 = vmul.f32 %v458, %v97
      %v460 = vadd.f32 %v459, 1e-05
      %v461 = vrsqrt.pop %v460
      %v462 = vmul.f32 %v454, %v461
      %v464 = vlaneseq
      %v465 = vshrl.u32 %v464, 7
      %v466 = vsub.s32 0, %v465
      %v467 = vrot.slane %v448, %v466
      %v469 = vmul.f32 %v462, %v467
      %v471 = vlaneseq
      %v472 = vshrl.u32 %v471, 7
      %v473 = vsub.s32 0, %v472
      %v474 = vrot.slane %v449, %v473
      %v476 = vadd.f32 %v469, %v474
      %477 = vst.msk [vmem:[#allocation2] sm:$0xff] %vm90, %v476
      %v478 = vld [vmem:[%s12] sm:$0x1]
      %v480 = vlaneseq
      %v481 = vshrl.u32 %v480, 7
      %v482 = vsub.s32 0, %v481
      %v483 = vrot.slane %v478, %v482
      %v485 = vadd.f32 %v447, %v483
      %486 = vst.msk [vmem:[#allocation3] sm:$0xff] %vm90, %v485
      %v487 = vld [vmem:[#allocation7] sm:$0xff]
      %v488 = vld [vmem:[#allocation9] sm:$0xff]
      %v490 = vsel %vm300, %v488, 0
      %492 = vmatprep.subr.mxu0 0.0
      %493 = vmatpush1.msra.mxu0 0.0
      %494 = vmatprep.subr.mxu0 0.0
      %495 = vmatpush1.msra.mxu0 0.0
      %496 = vmatprep.subr.mxu0 0.0
      %497 = vmatpush1.msra.mxu0 0.0
      %498 = vmatprep.subr.mxu0 0.0
      %499 = vmatpush1.msra.mxu0 0.0
      %500 = vmatprep.subr.mxu0 0.0
      %501 = vmatpush1.msra.mxu0 0.0
      %502 = vmatprep.subr.mxu0 0.0
      %503 = vmatpush1.msra.mxu0 0.0
      %504 = vmatprep.subr.mxu0 0.0
      %505 = vmatpush1.msra.mxu0 0.0
      %506 = vmatprep.subr.mxu0 0.0
      %507 = vmatpush1.msra.mxu0 0.0
      %508 = vmatprep.subr.mxu0 0.0
      %509 = vmatpush1.msra.mxu0 0.0
      %510 = vmatprep.subr.mxu0 0.0
      %511 = vmatpush1.msra.mxu0 0.0
      %512 = vmatprep.subr.mxu0 0.0
      %513 = vmatpush1.msra.mxu0 0.0
      %514 = vmatprep.subr.mxu0 0.0
      %515 = vmatpush1.msra.mxu0 0.0
      %516 = vmatprep.subr.mxu0 0.0
      %517 = vmatpush1.msra.mxu0 0.0
      %518 = vmatprep.subr.mxu0 0.0
      %519 = vmatpush1.msra.mxu0 0.0
      %520 = vmatprep.subr.mxu0 0.0
      %521 = vmatpush1.msra.mxu0 0.0
      %522 = vmatprep.subr.mxu0 0.0
      %523 = vmatpush1.msra.mxu0 %v295
      %524 = vmatprep.subr.mxu0 0.0
      %525 = vmatpush2.msra.mxu0 0.0
      %526 = vmatprep.subr.mxu0 0.0
      %527 = vmatpush2.msra.mxu0 0.0
      %528 = vmatprep.subr.mxu0 0.0
      %529 = vmatpush2.msra.mxu0 0.0
      %530 = vmatprep.subr.mxu0 0.0
      %531 = vmatpush2.msra.mxu0 0.0
      %532 = vmatprep.subr.mxu0 0.0
      %533 = vmatpush2.msra.mxu0 0.0
      %534 = vmatprep.subr.mxu0 0.0
      %535 = vmatpush2.msra.mxu0 0.0
      %536 = vmatprep.subr.mxu0 0.0
      %537 = vmatpush2.msra.mxu0 0.0
      %538 = vmatprep.subr.mxu0 0.0
      %539 = vmatpush2.msra.mxu0 0.0
      %540 = vmatprep.subr.mxu0 0.0
      %541 = vmatpush2.msra.mxu0 0.0
      %542 = vmatprep.subr.mxu0 0.0
      %543 = vmatpush2.msra.mxu0 0.0
      %544 = vmatprep.subr.mxu0 0.0
      %545 = vmatpush2.msra.mxu0 0.0
      %546 = vmatprep.subr.mxu0 0.0
      %547 = vmatpush2.msra.mxu0 0.0
      %548 = vmatprep.subr.mxu0 0.0
      %549 = vmatpush2.msra.mxu0 0.0
      %550 = vmatprep.subr.mxu0 0.0
      %551 = vmatpush2.msra.mxu0 0.0
      %552 = vmatprep.subr.mxu0 0.0
      %553 = vmatpush2.msra.mxu0 0.0
      %554 = vmatprep.subr.mxu0 0.0
      %555 = vmatpush2.msra.mxu0 0.0
      %556 = vmatprep.mubr.f32.mxu0 0.0
      %557 = vmatmul.mubr.f32.gmra.mxu0 %v490
      %v558 = vpop.f32.mrf.mxu0
      %v559 = vadd.f32 0.0, %v558
      %v560 = vpop.f32.mrf.mxu0
      %561 = vdwg.mxu0
      %v563 = vsel %vm300, %v487, 0
      %565 = vmatprep.subr.mxu0 0.0
      %566 = vmatpush1.msra.mxu0 0.0
      %567 = vmatprep.subr.mxu0 0.0
      %568 = vmatpush1.msra.mxu0 0.0
      %569 = vmatprep.subr.mxu0 0.0
      %570 = vmatpush1.msra.mxu0 0.0
      %571 = vmatprep.subr.mxu0 0.0
      %572 = vmatpush1.msra.mxu0 0.0
      %573 = vmatprep.subr.mxu0 0.0
      %574 = vmatpush1.msra.mxu0 0.0
      %575 = vmatprep.subr.mxu0 0.0
      %576 = vmatpush1.msra.mxu0 0.0
      %577 = vmatprep.subr.mxu0 0.0
      %578 = vmatpush1.msra.mxu0 0.0
      %579 = vmatprep.subr.mxu0 0.0
      %580 = vmatpush1.msra.mxu0 0.0
      %581 = vmatprep.subr.mxu0 0.0
      %582 = vmatpush1.msra.mxu0 0.0
      %583 = vmatprep.subr.mxu0 0.0
      %584 = vmatpush1.msra.mxu0 0.0
      %585 = vmatprep.subr.mxu0 0.0
      %586 = vmatpush1.msra.mxu0 0.0
      %587 = vmatprep.subr.mxu0 0.0
      %588 = vmatpush1.msra.mxu0 0.0
      %589 = vmatprep.subr.mxu0 0.0
      %590 = vmatpush1.msra.mxu0 0.0
      %591 = vmatprep.subr.mxu0 0.0
      %592 = vmatpush1.msra.mxu0 0.0
      %593 = vmatprep.subr.mxu0 0.0
      %594 = vmatpush1.msra.mxu0 0.0
      %595 = vmatprep.subr.mxu0 0.0
      %596 = vmatpush1.msra.mxu0 %v216
      %597 = vmatprep.subr.mxu0 0.0
      %598 = vmatpush2.msra.mxu0 0.0
      %599 = vmatprep.subr.mxu0 0.0
      %600 = vmatpush2.msra.mxu0 0.0
      %601 = vmatprep.subr.mxu0 0.0
      %602 = vmatpush2.msra.mxu0 0.0
      %603 = vmatprep.subr.mxu0 0.0
      %604 = vmatpush2.msra.mxu0 0.0
      %605 = vmatprep.subr.mxu0 0.0
      %606 = vmatpush2.msra.mxu0 0.0
      %607 = vmatprep.subr.mxu0 0.0
      %608 = vmatpush2.msra.mxu0 0.0
      %609 = vmatprep.subr.mxu0 0.0
      %610 = vmatpush2.msra.mxu0 0.0
      %611 = vmatprep.subr.mxu0 0.0
      %612 = vmatpush2.msra.mxu0 0.0
      %613 = vmatprep.subr.mxu0 0.0
      %614 = vmatpush2.msra.mxu0 0.0
      %615 = vmatprep.subr.mxu0 0.0
      %616 = vmatpush2.msra.mxu0 0.0
      %617 = vmatprep.subr.mxu0 0.0
      %618 = vmatpush2.msra.mxu0 0.0
      %619 = vmatprep.subr.mxu0 0.0
      %620 = vmatpush2.msra.mxu0 0.0
      %621 = vmatprep.subr.mxu0 0.0
      %622 = vmatpush2.msra.mxu0 0.0
      %623 = vmatprep.subr.mxu0 0.0
      %624 = vmatpush2.msra.mxu0 0.0
      %625 = vmatprep.subr.mxu0 0.0
      %626 = vmatpush2.msra.mxu0 0.0
      %627 = vmatprep.subr.mxu0 0.0
      %628 = vmatpush2.msra.mxu0 0.0
      %629 = vmatprep.mubr.f32.mxu0 0.0
      %630 = vmatmul.mubr.f32.gmra.mxu0 %v563
      %v631 = vpop.f32.mrf.mxu0
      %v632 = vadd.f32 %v559, %v631
      %v633 = vpop.f32.mrf.mxu0
      %634 = vdwg.mxu0
      %v635 = vadd.f32 %v632, %v87
      %v636 = vld [vmem:[%s7] sm:$0x1]
      %v637 = vld [vmem:[%s8] sm:$0x1]
      %v638 = vsel %vm90, %v635, 0.0
      %639 = vadd.xlane.f32.xlu0 %v638
      %v640 = vpop.xlane.xlu0 %639
      %v641 = vmul.f32 %v640, %v97
      %v642 = vsub.f32 %v635, %v641
      %v643 = vmul.f32 %v642, %v642
      %v644 = vsel %vm90, %v643, 0.0
      %645 = vadd.xlane.f32.xlu0 %v644
      %v646 = vpop.xlane.xlu0 %645
      %v647 = vmul.f32 %v646, %v97
      %v648 = vadd.f32 %v647, 1e-05
      %v649 = vrsqrt.pop %v648
      %v650 = vmul.f32 %v642, %v649
      %v652 = vlaneseq
      %v653 = vshrl.u32 %v652, 7
      %v654 = vsub.s32 0, %v653
      %v655 = vrot.slane %v636, %v654
      %v657 = vmul.f32 %v650, %v655
      %v659 = vlaneseq
      %v660 = vshrl.u32 %v659, 7
      %v661 = vsub.s32 0, %v660
      %v662 = vrot.slane %v637, %v661
      %v664 = vadd.f32 %v657, %v662
      %665 = vst.msk [vmem:[#allocation2 + $0x8] sm:$0xff] %vm90, %v664
      %v666 = vld [vmem:[%s12] sm:$0x1]
      %v668 = vlaneseq
      %v669 = vshrl.u32 %v668, 7
      %v670 = vsub.s32 0, %v669
      %v671 = vrot.slane %v666, %v670
      %v673 = vadd.f32 %v635, %v671
      %674 = vst.msk [vmem:[#allocation3 + $0x8] sm:$0xff] %vm90, %v673
    $region69: #{tpu_custom_call.1} parent=1 // pred_fallthru
      _
    %v675 = vld [vmem:[#allocation2] sm:$0xff]
    %v676 = vld [vmem:[#allocation2 + $0x8] sm:$0xff]
    %v677 = vld [vmem:[%s9] sm:$0xff]
    %v678 = vld [vmem:[%s9 + $0x8] sm:$0xff]
    %v679 = vld [vmem:[%s9 + $0x10] sm:$0xff]
    %v680 = vld [vmem:[%s9 + $0x18] sm:$0xff]
    %v681 = vld [vmem:[%s10] sm:$0x1]
    %v683 = vlaneseq
    %v684 = vshrl.u32 %v683, 7
    %v685 = vsub.s32 0, %v684
    %v686 = vrot.slane %v681, %v685
    %vm688 = vcmask 261120
    %v690 = vsel %vm688, %v675, 0
    %v693 = vsel %vm688, %v676, 0
    %695 = vmatprep.subr.mxu0 0.0
    %696 = vmatpush1.msra.mxu0 0.0
    %697 = vmatprep.subr.mxu0 0.0
    %698 = vmatpush1.msra.mxu0 0.0
    %699 = vmatprep.subr.mxu0 0.0
    %700 = vmatpush1.msra.mxu0 0.0
    %701 = vmatprep.subr.mxu0 0.0
    %702 = vmatpush1.msra.mxu0 0.0
    %703 = vmatprep.subr.mxu0 0.0
    %704 = vmatpush1.msra.mxu0 0.0
    %705 = vmatprep.subr.mxu0 0.0
    %706 = vmatpush1.msra.mxu0 0.0
    %707 = vmatprep.subr.mxu0 0.0
    %708 = vmatpush1.msra.mxu0 0.0
    %709 = vmatprep.subr.mxu0 0.0
    %710 = vmatpush1.msra.mxu0 0.0
    %711 = vmatprep.subr.mxu0 0.0
    %712 = vmatpush1.msra.mxu0 0.0
    %713 = vmatprep.subr.mxu0 0.0
    %714 = vmatpush1.msra.mxu0 0.0
    %715 = vmatprep.subr.mxu0 0.0
    %716 = vmatpush1.msra.mxu0 0.0
    %717 = vmatprep.subr.mxu0 0.0
    %718 = vmatpush1.msra.mxu0 0.0
    %719 = vmatprep.subr.mxu0 0.0
    %720 = vmatpush1.msra.mxu0 %v680
    %721 = vmatprep.subr.mxu0 0.0
    %722 = vmatpush1.msra.mxu0 %v679
    %723 = vmatprep.subr.mxu0 0.0
    %724 = vmatpush1.msra.mxu0 %v678
    %725 = vmatprep.subr.mxu0 0.0
    %726 = vmatpush1.msra.mxu0 %v677
    %727 = vmatprep.subr.mxu0 0.0
    %728 = vmatpush2.msra.mxu0 0.0
    %729 = vmatprep.subr.mxu0 0.0
    %730 = vmatpush2.msra.mxu0 0.0
    %731 = vmatprep.subr.mxu0 0.0
    %732 = vmatpush2.msra.mxu0 0.0
    %733 = vmatprep.subr.mxu0 0.0
    %734 = vmatpush2.msra.mxu0 0.0
    %735 = vmatprep.subr.mxu0 0.0
    %736 = vmatpush2.msra.mxu0 0.0
    %737 = vmatprep.subr.mxu0 0.0
    %738 = vmatpush2.msra.mxu0 0.0
    %739 = vmatprep.subr.mxu0 0.0
    %740 = vmatpush2.msra.mxu0 0.0
    %741 = vmatprep.subr.mxu0 0.0
    %742 = vmatpush2.msra.mxu0 0.0
    %743 = vmatprep.subr.mxu0 0.0
    %744 = vmatpush2.msra.mxu0 0.0
    %745 = vmatprep.subr.mxu0 0.0
    %746 = vmatpush2.msra.mxu0 0.0
    %747 = vmatprep.subr.mxu0 0.0
    %748 = vmatpush2.msra.mxu0 0.0
    %749 = vmatprep.subr.mxu0 0.0
    %750 = vmatpush2.msra.mxu0 0.0
    %751 = vmatprep.subr.mxu0 0.0
    %752 = vmatpush2.msra.mxu0 0.0
    %753 = vmatprep.subr.mxu0 0.0
    %754 = vmatpush2.msra.mxu0 0.0
    %755 = vmatprep.subr.mxu0 0.0
    %756 = vmatpush2.msra.mxu0 0.0
    %757 = vmatprep.subr.mxu0 0.0
    %758 = vmatpush2.msra.mxu0 0.0
    %759 = vmatprep.mubr.f32.mxu0 0.0
    %760 = vmatmul.mubr.f32.gmra.mxu0 %v690
    %v761 = vpop.f32.mrf.mxu0
    %v762 = vadd.f32 %v686, %v761
    %v763 = vpop.f32.mrf.mxu0
    %764 = vmatprep.mubr.f32.mxu0 0.0
    %765 = vmatmul.mubr.f32.gmra.mxu0 %v693
    %v766 = vpop.f32.mrf.mxu0
    %v767 = vadd.f32 %v686, %v766
    %v768 = vpop.f32.mrf.mxu0
    %769 = vdwg.mxu0
    %v770 = vmul.f32 %v762, 0.5
    %v771 = vmul.f32 %v767, 0.5
    %v772 = vmul.f32 %v762, 0.70710677
    %v773 = vmul.f32 %v767, 0.70710677
    %v774 = verf.f32.pop %v772
    %v775 = verf.f32.pop %v773
    %v776 = vadd.f32 %v774, 1.0
    %v777 = vadd.f32 %v775, 1.0
    %v778 = vmul.f32 %v770, %v776
    %v779 = vmul.f32 %v771, %v777
    %v780 = vld [vmem:[#allocation3] sm:$0xff]
    %v781 = vld [vmem:[#allocation3 + $0x8] sm:$0xff]
    %v782 = vld [vmem:[%s11] sm:$0xff]
    %v783 = vld [vmem:[%s11 + $0x8] sm:$0xff]
    %v784 = vld [vmem:[%s11 + $0x10] sm:$0xff]
    %v785 = vld [vmem:[%s11 + $0x18] sm:$0xff]
    %v786 = vld [vmem:[%s11 + $0x20] sm:$0xff]
    %v787 = vld [vmem:[%s11 + $0x28] sm:$0xff]
    %v788 = vld [vmem:[%s11 + $0x30] sm:$0xff]
    %v789 = vld [vmem:[%s11 + $0x38] sm:$0xff]
    %vm790 = vcmask 523264
    %v792 = vsel %vm790, %v778, 0
    %v795 = vsel %vm790, %v779, 0
    %797 = vmatprep.subr.mxu0 0.0
    %798 = vmatpush1.msra.mxu0 0.0
    %799 = vmatprep.subr.mxu0 0.0
    %800 = vmatpush1.msra.mxu0 0.0
    %801 = vmatprep.subr.mxu0 0.0
    %802 = vmatpush1.msra.mxu0 0.0
    %803 = vmatprep.subr.mxu0 0.0
    %804 = vmatpush1.msra.mxu0 0.0
    %805 = vmatprep.subr.mxu0 0.0
    %806 = vmatpush1.msra.mxu0 0.0
    %807 = vmatprep.subr.mxu0 0.0
    %808 = vmatpush1.msra.mxu0 0.0
    %809 = vmatprep.subr.mxu0 0.0
    %810 = vmatpush1.msra.mxu0 0.0
    %811 = vmatprep.subr.mxu0 0.0
    %812 = vmatpush1.msra.mxu0 0.0
    %813 = vmatprep.subr.mxu0 0.0
    %814 = vmatpush1.msra.mxu0 %v789
    %815 = vmatprep.subr.mxu0 0.0
    %816 = vmatpush1.msra.mxu0 %v788
    %817 = vmatprep.subr.mxu0 0.0
    %818 = vmatpush1.msra.mxu0 %v787
    %819 = vmatprep.subr.mxu0 0.0
    %820 = vmatpush1.msra.mxu0 %v786
    %821 = vmatprep.subr.mxu0 0.0
    %822 = vmatpush1.msra.mxu0 %v785
    %823 = vmatprep.subr.mxu0 0.0
    %824 = vmatpush1.msra.mxu0 %v784
    %825 = vmatprep.subr.mxu0 0.0
    %826 = vmatpush1.msra.mxu0 %v783
    %827 = vmatprep.subr.mxu0 0.0
    %828 = vmatpush1.msra.mxu0 %v782
    %829 = vmatprep.subr.mxu0 0.0
    %830 = vmatpush2.msra.mxu0 0.0
    %831 = vmatprep.subr.mxu0 0.0
    %832 = vmatpush2.msra.mxu0 0.0
    %833 = vmatprep.subr.mxu0 0.0
    %834 = vmatpush2.msra.mxu0 0.0
    %835 = vmatprep.subr.mxu0 0.0
    %836 = vmatpush2.msra.mxu0 0.0
    %837 = vmatprep.subr.mxu0 0.0
    %838 = vmatpush2.msra.mxu0 0.0
    %839 = vmatprep.subr.mxu0 0.0
    %840 = vmatpush2.msra.mxu0 0.0
    %841 = vmatprep.subr.mxu0 0.0
    %842 = vmatpush2.msra.mxu0 0.0
    %843 = vmatprep.subr.mxu0 0.0
    %844 = vmatpush2.msra.mxu0 0.0
    %845 = vmatprep.subr.mxu0 0.0
    %846 = vmatpush2.msra.mxu0 0.0
    %847 = vmatprep.subr.mxu0 0.0
    %848 = vmatpush2.msra.mxu0 0.0
    %849 = vmatprep.subr.mxu0 0.0
    %850 = vmatpush2.msra.mxu0 0.0
    %851 = vmatprep.subr.mxu0 0.0
    %852 = vmatpush2.msra.mxu0 0.0
    %853 = vmatprep.subr.mxu0 0.0
    %854 = vmatpush2.msra.mxu0 0.0
    %855 = vmatprep.subr.mxu0 0.0
    %856 = vmatpush2.msra.mxu0 0.0
    %857 = vmatprep.subr.mxu0 0.0
    %858 = vmatpush2.msra.mxu0 0.0
    %859 = vmatprep.subr.mxu0 0.0
    %860 = vmatpush2.msra.mxu0 0.0
    %861 = vmatprep.mubr.f32.mxu0 0.0
    %862 = vmatmul.mubr.f32.gmra.mxu0 %v792
    %v863 = vpop.f32.mrf.mxu0
    %v864 = vadd.f32 0.0, %v863
    %v865 = vpop.f32.mrf.mxu0
    %866 = vmatprep.mubr.f32.mxu0 0.0
    %867 = vmatmul.mubr.f32.gmra.mxu0 %v795
    %v868 = vpop.f32.mrf.mxu0
    %v869 = vadd.f32 0.0, %v868
    %v870 = vpop.f32.mrf.mxu0
    %871 = vdwg.mxu0
    %v872 = vadd.f32 %v780, %v864
    %v873 = vadd.f32 %v781, %v869
    %874 = vst.msk [vmem:[#allocation3] sm:$0xff] %vm688, %v872
    %875 = vst.msk [vmem:[#allocation3 + $0x8] sm:$0xff] %vm688, %v873
    // Predicated region
    $region70: #{tpu_custom_call.1} parent=1 // pred_check
      %p876 = pneg %p82
    $region71: #{tpu_custom_call.1} parent=1 // pred_check_branch
      %878 = sbr.rel (%p876) target = $region73
    $region72: #{tpu_custom_call.1} parent=1 // pred_region
      %v879 = vld [vmem:[#allocation3] sm:$0xff]
      %v880 = vld [vmem:[#allocation3 + $0x8] sm:$0xff]
      %881 = vst.msk [vmem:[#allocation10] sm:$0xff] %vm688, %v879
      %882 = vst.msk [vmem:[#allocation10 + $0x8] sm:$0xff] %vm688, %v880
    $region73: #{tpu_custom_call.1} parent=1 // pred_fallthru
      _
    // Predicated region
    $region74: #{tpu_custom_call.1} parent=1 // pred_check
      _
    $region75: #{tpu_custom_call.1} parent=1 // pred_check_branch
      %884 = sbr.rel (0) target = $region77
    $region76: #{tpu_custom_call.1} parent=1 // pred_region
      %s886 = ssub.s32 256, 256
      %887 = vsyncadd [#allocation6], %s886
      %s888 = sshll.u32 [#allocation10], 4
      %s889 = int_to_ptr.vmem [resolvable:$true] %s888
      %894 = dma.vmem_to_hbm [thread:$0]  %s889, 256, %s13, [#allocation6], 128, 128, 8
    $region77: #{tpu_custom_call.1} parent=1 // pred_fallthru
      _
    // Predicated region
    $region78: #{tpu_custom_call.1} parent=1 // pred_check
      _
    $region79: #{tpu_custom_call.1} parent=1 // pred_check_branch
      %896 = sbr.rel (0) target = $region81
    $region80: #{tpu_custom_call.1} parent=1 // pred_region
      %897 = dma.done [#allocation6], 256
    $region81: #{tpu_custom_call.1} parent=1 // pred_fallthru
      _
    %898 = vsyncpa [#allocation5], 1
    %899 = vsyncpa [#allocation8], 1
    %900 = vsyncpa [#allocation6], 1

</llo_original>
